<compile_context>
chip_gen: v7x
topology: tpu7x:2x2x1
jax: 0.10.0
libtpu: 0.0.40
codegen_flags: <defaults>
</compile_context>

<pallas_src>
import jax
import jax.numpy as jnp
from jax import lax
from jax.experimental import pallas as pl
from jax.experimental.pallas import tpu as pltpu

D_MODEL = 32
VOCAB = 128
HI = lax.Precision.HIGHEST  # pure-JAX reference only


# ----------------------- fused linear + log_softmax kernel -------------------
def _generator_kernel(x_ref, w_ref, b_ref, o_ref):
    # x: (block_rows, D_MODEL), w: (D_MODEL, VOCAB), b: (1, VOCAB)
    logits = (
        jnp.dot(x_ref[...], w_ref[...], preferred_element_type=jnp.float32)
        + b_ref[...]
    )                                                   # (block_rows, VOCAB) f32
    # numerically stable log_softmax along the lane (vocab) axis, all f32
    m = jnp.max(logits, axis=-1, keepdims=True)
    s = logits - m
    lse = jnp.log(jnp.sum(jnp.exp(s), axis=-1, keepdims=True))
    o_ref[...] = (s - lse).astype(o_ref.dtype)          # cast only at the store


def _round_up(n, m):
    return ((n + m - 1) // m) * m


def generator_forward(x, w, b, *, block_rows=1024, out_dtype=None):
    """x: (..., d_model)  ->  log_softmax(x @ w + b) with shape (..., vocab)."""
    d_model = x.shape[-1]
    vocab = w.shape[1]
    if out_dtype is None:
        out_dtype = x.dtype

    x2 = x.reshape(-1, d_model)                          # lane-contiguous slab
    n_rows = x2.shape[0]

    # Row tile: multiple of 16 (legal sublane tiling for both f32 and bf16),
    # never larger than the (rounded-up) row count for tiny inputs.
    SUB = 16
    block_rows = max(SUB, min(_round_up(block_rows, SUB), _round_up(n_rows, SUB)))

    # Pad rows up to a multiple of block_rows (padded rows just compute
    # log_softmax(b) -- finite, sliced off below).  Keeps the grid pipelined
    # and the VMEM footprint bounded at any batch*seq size.
    n_rows_p = _round_up(n_rows, block_rows)
    if n_rows_p != n_rows:
        x2 = jnp.pad(x2, ((0, n_rows_p - n_rows), (0, 0)))
    grid = (n_rows_p // block_rows,)

    in_itemsize = jnp.dtype(x.dtype).itemsize
    out_itemsize = jnp.dtype(out_dtype).itemsize
    w_itemsize = jnp.dtype(w.dtype).itemsize

    # Working set: double-buffered x and out tiles + resident W, b (+ headroom).
    working_set = (
        2 * block_rows * d_model * in_itemsize
        + 2 * block_rows * vocab * out_itemsize
        + d_model * vocab * w_itemsize
        + vocab * w_itemsize
    )
    vmem_limit = int(min(max(4 * working_set, 8 << 20), 48 << 20))

    cost = pl.CostEstimate(
        flops=2 * n_rows_p * d_model * vocab,
        transcendentals=n_rows_p * vocab,
        bytes_accessed=(
            n_rows_p * d_model * in_itemsize
            + d_model * vocab * w_itemsize
            + vocab * w_itemsize
            + n_rows_p * vocab * out_itemsize
        ),
    )

    out = pl.pallas_call(
        _generator_kernel,
        out_shape=jax.ShapeDtypeStruct((n_rows_p, vocab), out_dtype),
        grid=grid,
        in_specs=[
            pl.BlockSpec((block_rows, d_model), lambda i: (i, 0)),
            pl.BlockSpec((d_model, vocab), lambda i: (0, 0)),   # W resident
            pl.BlockSpec((1, vocab), lambda i: (0, 0)),         # b resident
        ],
        out_specs=pl.BlockSpec((block_rows, vocab), lambda i: (i, 0)),
        compiler_params=pltpu.CompilerParams(
            dimension_semantics=("parallel",),   # row axis shards across TCs (v7x)
            vmem_limit_bytes=vmem_limit,
        ),
        cost_estimate=cost,
    )(x2, w, b.reshape(1, vocab))

    out = out[:n_rows]
    return out.reshape(*x.shape[:-1], vocab)


# ------------------------------ pure-JAX reference ----------------------------
def ref_forward(x, w, b):
    logits = jnp.dot(x, w, precision=HI) + b
    return jax.nn.log_softmax(logits, axis=-1)


# --------------------------------- params -------------------------------------
def init_params(key):
    kw, kb = jax.random.split(key)
    # Stored as (d_model, vocab): transpose of torch's nn.Linear weight, so the
    # kernel computes x @ W + b (same math as x @ weight.T + bias).
    w = jax.random.normal(kw, (D_MODEL, VOCAB), jnp.float32) / jnp.sqrt(
        jnp.float32(D_MODEL)
    )
    b = jax.random.normal(kb, (VOCAB,), jnp.float32) * 0.01
    return w, b


if __name__ == "__main__":
    key = jax.random.PRNGKey(0)
    kx, kp, kx2 = jax.random.split(key, 3)
    w, b = init_params(kp)

    fwd = jax.jit(generator_forward, static_argnames=("block_rows", "out_dtype"))

    # Small canonical test (B=2, T=8, d_model=32 -> vocab=128): single block.
    B, T = 2, 8
    x = jax.random.normal(kx, (B, T, D_MODEL), jnp.float32)
    out = jax.block_until_ready(fwd(x, w, b))
    ref = ref_forward(x, w, b)
    assert out.shape == (B, T, VOCAB)
    assert jnp.allclose(out, ref, atol=2e-3, rtol=2e-3), (
        f"max abs err {jnp.max(jnp.abs(out - ref))}"
    )
    assert jnp.allclose(jnp.sum(jnp.exp(out), axis=-1), jnp.ones((B, T)), atol=1e-4)

    # Non-divisible row count with a small tile: exercises the padded,
    # multi-step pipelined grid path (pad 111 -> 128 rows, grid=(4,)).
    x_odd = jax.random.normal(kx2, (3, 37, D_MODEL), jnp.float32)
    out_odd = jax.block_until_ready(fwd(x_odd, w, b, block_rows=32))
    ref_odd = ref_forward(x_odd, w, b)
    assert out_odd.shape == (3, 37, VOCAB)
    assert jnp.allclose(out_odd, ref_odd, atol=2e-3, rtol=2e-3), (
        f"max abs err {jnp.max(jnp.abs(out_odd - ref_odd))}"
    )

    print("KERNEL_OK")
</pallas_src>

<mosaic_0001>
module attributes {stable_mosaic.version = 11 : i64} {
  func.func @_generator_kernel(%arg0: i32, %arg1: memref<16x32xf32, #tpu.memory_space<vmem>>, %arg2: memref<32x128xf32, #tpu.memory_space<vmem>>, %arg3: memref<1x128xf32, #tpu.memory_space<vmem>>, %arg4: memref<16x128xf32, #tpu.memory_space<vmem>>) attributes {dimension_semantics = [#tpu.dimension_semantics<parallel>], iteration_bounds = array<i64: 1>, scalar_prefetch = 0 : i64, scratch_operands = 0 : i64, tpu.core_type = #tpu.core_type<tc>, window_params = [{transform_indices = @transform_0, window_bounds = array<i64: 16, 32>}, {pipeline_mode = #tpu.pipeline_mode<synchronous>, transform_indices = @transform_1, window_bounds = array<i64: 32, 128>}, {pipeline_mode = #tpu.pipeline_mode<synchronous>, transform_indices = @transform_2, window_bounds = array<i64: 1, 128>}, {transform_indices = @transform_3, window_bounds = array<i64: 16, 128>}]} {
    %c0 = arith.constant 0 : index
    %c0_0 = arith.constant 0 : index
    %0 = vector.load %arg1[%c0, %c0_0] : memref<16x32xf32, #tpu.memory_space<vmem>>, vector<16x32xf32>
    %c0_1 = arith.constant 0 : index
    %c0_2 = arith.constant 0 : index
    %1 = vector.load %arg2[%c0_1, %c0_2] : memref<32x128xf32, #tpu.memory_space<vmem>>, vector<32x128xf32>
    %cst = arith.constant dense<0.000000e+00> : vector<16x128xf32>
    %2 = tpu.matmul %0, %1, %cst {dimension_numbers = #tpu.dot_dimension_numbers<[1], [0], [0], [1], [0, 0, 1, 1], [], []>} : vector<16x32xf32>, vector<32x128xf32>, vector<16x128xf32> -> vector<16x128xf32>
    %c0_3 = arith.constant 0 : index
    %c0_4 = arith.constant 0 : index
    %3 = vector.load %arg3[%c0_3, %c0_4] : memref<1x128xf32, #tpu.memory_space<vmem>>, vector<1x128xf32>
    %4 = vector.broadcast %3 : vector<1x128xf32> to vector<16x128xf32>
    %5 = arith.addf %2, %4 : vector<16x128xf32>
    %cst_5 = arith.constant dense<0xFF800000> : vector<16xf32>
    %6 = vector.multi_reduction <maximumf>, %5, %cst_5 [1] : vector<16x128xf32> to vector<16xf32>
    %7 = vector.shape_cast %6 : vector<16xf32> to vector<16x1xf32>
    %8 = vector.broadcast %7 : vector<16x1xf32> to vector<16x128xf32>
    %9 = arith.subf %5, %8 : vector<16x128xf32>
    %10 = math.exp %9 : vector<16x128xf32>
    %cst_6 = arith.constant dense<0.000000e+00> : vector<16xf32>
    %11 = vector.multi_reduction <add>, %10, %cst_6 [1] : vector<16x128xf32> to vector<16xf32>
    %12 = vector.shape_cast %11 : vector<16xf32> to vector<16x1xf32>
    %13 = math.log %12 : vector<16x1xf32>
    %14 = vector.broadcast %13 : vector<16x1xf32> to vector<16x128xf32>
    %15 = arith.subf %9, %14 : vector<16x128xf32>
    %c0_7 = arith.constant 0 : index
    %c0_8 = arith.constant 0 : index
    %16 = vector.load %arg4[%c0_7, %c0_8] : memref<16x128xf32, #tpu.memory_space<vmem>>, vector<16x128xf32>
    tpu.vector_store %arg4[%c0_7, %c0_8], %15 {strides = array<i32>} : memref<16x128xf32, #tpu.memory_space<vmem>>, vector<16x128xf32>,
    return
  }
  func.func @transform_0(%arg0: i32) -> (i32, i32) {
    %c0_i32 = arith.constant 0 : i32
    %c0_i32_0 = arith.constant 0 : i32
    return %arg0, %c0_i32 : i32, i32
  }
  func.func @transform_1(%arg0: i32) -> (i32, i32) {
    %c0_i32 = arith.constant 0 : i32
    %c0_i32_0 = arith.constant 0 : i32
    %c0_i32_1 = arith.constant 0 : i32
    return %c0_i32, %c0_i32_0 : i32, i32
  }
  func.func @transform_2(%arg0: i32) -> (i32, i32) {
    %c0_i32 = arith.constant 0 : i32
    %c0_i32_0 = arith.constant 0 : i32
    %c0_i32_1 = arith.constant 0 : i32
    return %c0_i32, %c0_i32_0 : i32, i32
  }
  func.func @transform_3(%arg0: i32) -> (i32, i32) {
    %c0_i32 = arith.constant 0 : i32
    %c0_i32_0 = arith.constant 0 : i32
    return %arg0, %c0_i32 : i32, i32
  }
}

</mosaic_0001>

<llo_original>
// kernel: generator_forward.1
$region0: #{generator_forward.1}
  #allocation0 [shape = 'u32[]', space=smem, size = 0x4, offset = 0x4, fixed_abs, tag = 'smem constant byte address 0x4 - core index']
  #allocation1 [shape = 'u32[144,128]{1,0:T(1,128)}', space=vmem, size = 0x12000, scoped, tag = 'internal scratch']
  %s0 = inlined_call_operand.hbm [shape: f32[16,32], index: 0, kind: input, shape index: {}]
  %s1 = inlined_call_operand.hbm [shape: f32[32,128], index: 1, kind: input, shape index: {}]
  %s2 = inlined_call_operand.vmem [shape: f32[1,128], index: 2, kind: input, shape index: {}]
  %s3 = inlined_call_operand.hbm [shape: f32[16,128], index: 3, kind: output, shape index: {}]
  %s4 = sld [smem:[#allocation0]]
  $region30: #{generator_forward.1} parent=0
    _
  %s6 = ssub.s32 1, %s4
  %s7 = scalar_select 0, %s6, %s4
  $region1: #{generator_forward.1} parent=0
    #allocation2 [shape = 'u8[8192]{0}', space=vmem, size = 0x2000, scoped, tag = 'input window, operand 0, single buffered']
    #allocation3 [shape = 's32[1]{0}', space=sflag, size = 0x4, scoped, tag = 'scoped memory for generator_forward.1']
    #allocation4 [shape = 's32[1]{0}', space=sflag, size = 0x4, scoped, tag = 'scoped memory for generator_forward.1']
    #allocation5 [shape = 'u8[16384]{0}', space=vmem, size = 0x4000, scoped, tag = 'input window, operand 1, single buffered']
    #allocation6 [shape = 's32[1]{0}', space=sflag, size = 0x4, scoped, tag = 'scoped memory for generator_forward.1']
    #allocation7 [shape = 'u8[8192]{0}', space=vmem, size = 0x2000, scoped, tag = 'output window, operand 0, single buffered']
    %8 = vsyncpa [#allocation3], 0
    %9 = vsyncpa [#allocation6], 0
    %10 = vsyncpa [#allocation4], 0
    // Predicated region
    $region2: #{generator_forward.1} parent=1 // pred_check
      _
    $region3: #{generator_forward.1} parent=1 // pred_check_branch
      %12 = sbr.rel (0) target = $region5
    $region4: #{generator_forward.1} parent=1 // pred_region
      %s14 = ssub.s32 256, 256
      %15 = vsyncadd [#allocation3], %s14
      %s16 = sshll.u32 [#allocation2], 4
      %s17 = int_to_ptr.vmem [resolvable:$true] %s16
      %22 = dma.hbm_to_vmem [thread:$0]  %s0, 256, %s17, [#allocation3], 128, 128, 8
    $region5: #{generator_forward.1} parent=1 // pred_fallthru
      _
    // Predicated region
    $region6: #{generator_forward.1} parent=1 // pred_check
      _
    $region7: #{generator_forward.1} parent=1 // pred_check_branch
      %24 = sbr.rel (0) target = $region9
    $region8: #{generator_forward.1} parent=1 // pred_region
      %s26 = ssub.s32 512, 512
      %27 = vsyncadd [#allocation6], %s26
      %s28 = sshll.u32 [#allocation5], 4
      %s29 = int_to_ptr.vmem [resolvable:$true] %s28
      %34 = dma.hbm_to_vmem [thread:$0]  %s1, 512, %s29, [#allocation6], 128, 128, 8
    $region9: #{generator_forward.1} parent=1 // pred_fallthru
      _
    // Predicated region
    $region10: #{generator_forward.1} parent=1 // pred_check
      _
    $region11: #{generator_forward.1} parent=1 // pred_check_branch
      %36 = sbr.rel (0) target = $region13
    $region12: #{generator_forward.1} parent=1 // pred_region
      _
    $region13: #{generator_forward.1} parent=1 // pred_fallthru
      _
    // Predicated region
    $region14: #{generator_forward.1} parent=1 // pred_check
      _
    $region15: #{generator_forward.1} parent=1 // pred_check_branch
      %38 = sbr.rel (0) target = $region17
    $region16: #{generator_forward.1} parent=1 // pred_region
      %39 = dma.done [#allocation3], 256
    $region17: #{generator_forward.1} parent=1 // pred_fallthru
      _
    // Predicated region
    $region18: #{generator_forward.1} parent=1 // pred_check
      _
    $region19: #{generator_forward.1} parent=1 // pred_check_branch
      %41 = sbr.rel (0) target = $region21
    $region20: #{generator_forward.1} parent=1 // pred_region
      %42 = dma.done [#allocation6], 512
    $region21: #{generator_forward.1} parent=1 // pred_fallthru
      _
    %v43 = vld [vmem:[#allocation2] sm:$0xff]
    %v44 = vld [vmem:[#allocation2 + $0x8] sm:$0xff]
    %v45 = vld [vmem:[#allocation5] sm:$0xff]
    %v46 = vld [vmem:[#allocation5 + $0x8] sm:$0xff]
    %v47 = vld [vmem:[#allocation5 + $0x10] sm:$0xff]
    %v48 = vld [vmem:[#allocation5 + $0x18] sm:$0xff]
    %v49 = vld [vmem:[%s2] sm:$0x1]
    %v51 = vlaneseq
    %v52 = vshrl.u32 %v51, 7
    %v53 = vsub.s32 0, %v52
    %v54 = vrot.slane %v49, %v53
    %vm56 = vcmask 261120
    %v58 = vsel %vm56, %v43, 0
    %v61 = vsel %vm56, %v44, 0
    %63 = vmatprep.subr.mxu0 0.0
    %64 = vmatpush1.msra.mxu0 %v45
    %65 = vmatprep.subr.mxu0 0.0
    %66 = vmatpush1.msra.mxu0 %v46
    %67 = vmatprep.subr.mxu0 0.0
    %68 = vmatpush1.msra.mxu0 %v47
    %69 = vmatprep.subr.mxu0 0.0
    %70 = vmatpush1.msra.mxu0 %v48
    %71 = vmatprep.subr.mxu0 0.0
    %72 = vmatpush1.msra.mxu0 0.0
    %73 = vmatprep.subr.mxu0 0.0
    %74 = vmatpush1.msra.mxu0 0.0
    %75 = vmatprep.subr.mxu0 0.0
    %76 = vmatpush1.msra.mxu0 0.0
    %77 = vmatprep.subr.mxu0 0.0
    %78 = vmatpush1.msra.mxu0 0.0
    %79 = vmatprep.subr.mxu0 0.0
    %80 = vmatpush1.msra.mxu0 0.0
    %81 = vmatprep.subr.mxu0 0.0
    %82 = vmatpush1.msra.mxu0 0.0
    %83 = vmatprep.subr.mxu0 0.0
    %84 = vmatpush1.msra.mxu0 0.0
    %85 = vmatprep.subr.mxu0 0.0
    %86 = vmatpush1.msra.mxu0 0.0
    %87 = vmatprep.subr.mxu0 0.0
    %88 = vmatpush1.msra.mxu0 0.0
    %89 = vmatprep.subr.mxu0 0.0
    %90 = vmatpush1.msra.mxu0 0.0
    %91 = vmatprep.subr.mxu0 0.0
    %92 = vmatpush1.msra.mxu0 0.0
    %93 = vmatprep.subr.mxu0 0.0
    %94 = vmatpush1.msra.mxu0 0.0
    %95 = vmatprep.subr.mxu0 0.0
    %96 = vmatpush1.msra.mxu0 0.0
    %97 = vmatprep.subr.mxu0 0.0
    %98 = vmatpush1.msra.mxu0 0.0
    %99 = vmatprep.subr.mxu0 0.0
    %100 = vmatpush1.msra.mxu0 0.0
    %101 = vmatprep.subr.mxu0 0.0
    %102 = vmatpush1.msra.mxu0 0.0
    %103 = vmatprep.subr.mxu0 0.0
    %104 = vmatpush1.msra.mxu0 0.0
    %105 = vmatprep.subr.mxu0 0.0
    %106 = vmatpush1.msra.mxu0 0.0
    %107 = vmatprep.subr.mxu0 0.0
    %108 = vmatpush1.msra.mxu0 0.0
    %109 = vmatprep.subr.mxu0 0.0
    %110 = vmatpush1.msra.mxu0 0.0
    %111 = vmatprep.subr.mxu0 0.0
    %112 = vmatpush1.msra.mxu0 0.0
    %113 = vmatprep.subr.mxu0 0.0
    %114 = vmatpush1.msra.mxu0 0.0
    %115 = vmatprep.subr.mxu0 0.0
    %116 = vmatpush1.msra.mxu0 0.0
    %117 = vmatprep.subr.mxu0 0.0
    %118 = vmatpush1.msra.mxu0 0.0
    %119 = vmatprep.subr.mxu0 0.0
    %120 = vmatpush1.msra.mxu0 0.0
    %121 = vmatprep.subr.mxu0 0.0
    %122 = vmatpush1.msra.mxu0 0.0
    %123 = vmatprep.subr.mxu0 0.0
    %124 = vmatpush1.msra.mxu0 0.0
    %125 = vmatprep.subr.mxu0 0.0
    %126 = vmatpush1.msra.mxu0 0.0
    %127 = vmatprep.mubr.f32.mxu0 0.0
    %128 = vmatmul.mubr.f32.gmra.mrb[0].mxu0 %v58
    %v129 = vpop.f32.mrb[0].mxu0
    %v130 = vadd.f32 %v54, %v129
    %v131 = vpop.f32.mrb[0].mxu0
    %132 = vmatprep.mubr.f32.mxu0 0.0
    %133 = vmatmul.mubr.f32.gmra.mrb[0].mxu0 %v61
    %v134 = vpop.f32.mrb[0].mxu0
    %v135 = vadd.f32 %v54, %v134
    %v136 = vpop.f32.mrb[0].mxu0
    %137 = vdwg.mxu0
    %138 = vmax.xlane.f32.xlu0 %v130
    %v139 = vpop.xlane.xlu0 %138
    %140 = vmax.xlane.f32.xlu0 %v135
    %v141 = vpop.xlane.xlu0 %140
    %v142 = vsub.f32 %v130, %v139
    %v143 = vsub.f32 %v135, %v141
    %v144 = vmul.f32 %v142, 1.442695
    %v145 = vpow.pop %v144
    %v146 = vmul.f32 %v143, 1.442695
    %v147 = vpow.pop %v146
    %148 = vadd.xlane.f32.xlu0 %v145
    %v149 = vpop.xlane.xlu0 %148
    %150 = vadd.xlane.f32.xlu0 %v147
    %v151 = vpop.xlane.xlu0 %150
    %v152 = vlog2.pop %v149
    %v153 = vmul.f32 %v152, 0.6931472
    %v154 = vlog2.pop %v151
    %v155 = vmul.f32 %v154, 0.6931472
    %v156 = vsub.f32 %v142, %v153
    %v157 = vsub.f32 %v143, %v155
    %158 = vst [vmem:[#allocation7] sm:$0xff] %v156
    %159 = vst [vmem:[#allocation7 + $0x8] sm:$0xff] %v157
    // Predicated region
    $region22: #{generator_forward.1} parent=1 // pred_check
      _
    $region23: #{generator_forward.1} parent=1 // pred_check_branch
      %161 = sbr.rel (0) target = $region25
    $region24: #{generator_forward.1} parent=1 // pred_region
      %s163 = ssub.s32 256, 256
      %164 = vsyncadd [#allocation4], %s163
      %s165 = sshll.u32 [#allocation7], 4
      %s166 = int_to_ptr.vmem [resolvable:$true] %s165
      %171 = dma.vmem_to_hbm [thread:$0]  %s166, 256, %s3, [#allocation4], 128, 128, 8
    $region25: #{generator_forward.1} parent=1 // pred_fallthru
      _
    // Predicated region
    $region26: #{generator_forward.1} parent=1 // pred_check
      _
    $region27: #{generator_forward.1} parent=1 // pred_check_branch
      %173 = sbr.rel (0) target = $region29
    $region28: #{generator_forward.1} parent=1 // pred_region
      %174 = dma.done [#allocation4], 256
    $region29: #{generator_forward.1} parent=1 // pred_fallthru
      _
    %175 = vsyncpa [#allocation3], 1
    %176 = vsyncpa [#allocation6], 1
    %177 = vsyncpa [#allocation4], 1

</llo_original>
